<compile_context>
chip_gen: v6e
topology: v6e:2x2x1
jax: 0.10.0
libtpu: 0.0.40
codegen_flags: <defaults>
</compile_context>

<pallas_src>
import functools

import jax
import jax.numpy as jnp
from jax import lax
from jax.experimental import pallas as pl
from jax.experimental.pallas import tpu as pltpu


def _round_up(v, m):
    return ((v + m - 1) // m) * m


def _linear_encoder_kernel(*refs, emb_norm: bool):
    """Tiled y = x @ W_eff + b; optional row L2-norm applied as a precomputed
    per-row rsqrt factor in the k==last epilogue."""
    if emb_norm:
        x_ref, w_ref, inv_ref, b_ref, o_ref, acc_ref = refs
    else:
        x_ref, w_ref, b_ref, o_ref, acc_ref = refs
        inv_ref = None

    k = pl.program_id(2)

    @pl.when(k == 0)
    def _init():
        acc_ref[...] = jnp.zeros_like(acc_ref)

    # Weight is pre-transposed to (D, C): standard (1),(0) contraction feeds the
    # MXU directly (no per-tile transpose competing for the vector-extended slots).
    acc_ref[...] += jnp.dot(x_ref[...], w_ref[...],
                            preferred_element_type=jnp.float32)

    @pl.when(k == pl.num_programs(2) - 1)
    def _finalize():
        y = acc_ref[...]
        if emb_norm:
            y = y * inv_ref[...]          # == F.normalize(x) before the matmul
        o_ref[...] = (y + b_ref[...]).astype(o_ref.dtype)


def prepare_linear_encoder(weight, bias, *, wn=False, emb_norm=False,
                           unit_wnorm=False, weight_g=None,
                           tn=512, tk=1024, mxu_dtype=None):
    """One-time parameter-side prep (hoisted out of the per-call path):
       weight-norm folded into the weight, transpose to (D, C), pad to tile
       multiples, optional cast to the MXU operand dtype (e.g. jnp.bfloat16 on
       v6e/v7x). Returns a dict consumed by linear_encoder_forward."""
    wn = wn or unit_wnorm
    C, D = weight.shape
    w = weight.astype(jnp.float32)
    if wn:
        v_norm = jnp.sqrt(jnp.sum(w * w, axis=1, keepdims=True))        # (C, 1)
        if unit_wnorm:
            g = jnp.ones((C, 1), jnp.float32)                           # weight_g.fill_(1.0)
        else:
            g = weight_g.reshape(C, 1).astype(jnp.float32)
        w = w * (g / v_norm)                                            # W_eff = g * V / ||V||

    # Tile sizes respecting the (8, 128) rule; keep the output lane dim 128-dense.
    tn = min(tn, _round_up(C, 128))
    tk = min(tk, _round_up(D, 128))
    Cp, Dp = _round_up(C, tn), _round_up(D, tk)

    op_dtype = mxu_dtype if mxu_dtype is not None else weight.dtype
    w_t = jnp.pad(w, ((0, Cp - C), (0, Dp - D))).T.astype(op_dtype)     # (Dp, Cp)
    b = jnp.pad(bias.astype(jnp.float32).reshape(1, C), ((0, 0), (0, Cp - C)))

    return dict(w_t=w_t, bias=b, num_classes=C, emb_norm=emb_norm,
                tn=tn, tk=tk, mxu_dtype=mxu_dtype)


@functools.partial(
    jax.jit,
    static_argnames=("emb_norm", "num_classes", "tn", "tk", "tm_hint", "mxu_dtype"))
def _linear_encoder_apply(x, w_t, bias, *, emb_norm, num_classes, tn, tk,
                          tm_hint, mxu_dtype):
    out_dtype = x.dtype
    B, D = x.shape
    Dp, Cp = w_t.shape

    # ---- per-call activation-side prep (cheap; fused by XLA under jit) ----
    inv = None
    if emb_norm:
        xf = x.astype(jnp.float32)
        # F.normalize: x / max(||x||, 1e-12) == x * rsqrt(max(sumsq, 1e-24))
        inv = lax.rsqrt(jnp.maximum(
            jnp.sum(xf * xf, axis=-1, keepdims=True), 1e-24))           # (B, 1) f32
    if mxu_dtype is not None:
        x = x.astype(mxu_dtype)

    tm = min(tm_hint, _round_up(B, 8))
    Bp = _round_up(B, tm)

    # v7x has 2 TensorCores: ensure at least one "parallel" axis has >= 2 blocks.
    if Bp // tm == 1 and Cp // tn == 1 and Cp >= 256:
        tn = Cp // 2 if (Cp // 2) % 128 == 0 else 128

    x_p = x if (Bp == B and Dp == D) else jnp.pad(x, ((0, Bp - B), (0, Dp - D)))
    if emb_norm and Bp != B:
        inv = jnp.pad(inv, ((0, Bp - B), (0, 0)))

    grid = (Bp // tm, Cp // tn, Dp // tk)

    # NOTE(v5e): if profiling shows exposed DMA, add pipeline_mode=pl.Buffered(3)
    # to the x / weight BlockSpecs below.
    in_specs = [
        pl.BlockSpec((tm, tk), lambda i, j, k: (i, k)),      # x tile
        pl.BlockSpec((tk, tn), lambda i, j, k: (k, j)),      # pre-transposed W_eff tile
    ]
    inputs = [x_p, w_t]
    if emb_norm:
        in_specs.append(pl.BlockSpec((tm, 1), lambda i, j, k: (i, 0)))  # row rsqrt factor
        inputs.append(inv)
    in_specs.append(pl.BlockSpec((1, tn), lambda i, j, k: (0, j)))      # bias
    inputs.append(bias)

    # VMEM limit derived from the actual footprint (double-buffered in/out + acc),
    # with headroom for compiler scratch; capped below v7x's 64 MiB physical VMEM.
    x_b = x_p.dtype.itemsize
    w_b = w_t.dtype.itemsize
    o_b = jnp.dtype(out_dtype).itemsize
    buffers = 2 * (tm * tk * x_b + tk * tn * w_b + tn * 4
                   + (tm * 4 if emb_norm else 0) + tm * tn * o_b)
    vmem_limit = int(min(max(buffers + tm * tn * 4 + (8 << 20), 32 << 20), 60 << 20))

    out_p = pl.pallas_call(
        functools.partial(_linear_encoder_kernel, emb_norm=emb_norm),
        out_shape=jax.ShapeDtypeStruct((Bp, Cp), out_dtype),
        grid_spec=pltpu.PrefetchScalarGridSpec(
            num_scalar_prefetch=0,
            grid=grid,
            in_specs=in_specs,
            out_specs=pl.BlockSpec((tm, tn), lambda i, j, k: (i, j)),
            scratch_shapes=[pltpu.VMEM((tm, tn), jnp.float32)],         # f32 accumulator
        ),
        compiler_params=pltpu.CompilerParams(
            dimension_semantics=("parallel", "parallel", "arbitrary"),
            vmem_limit_bytes=vmem_limit,
        ),
    )(*inputs)

    return out_p[:B, :num_classes]


def linear_encoder_forward(x, params, *, tm_hint=512):
    """Per-call path: only x-side work (pad, optional row-norm factor) + the kernel."""
    return _linear_encoder_apply(
        x, params["w_t"], params["bias"],
        emb_norm=params["emb_norm"], num_classes=params["num_classes"],
        tn=params["tn"], tk=params["tk"], tm_hint=tm_hint,
        mxu_dtype=params["mxu_dtype"])


def _reference(x, weight, bias, *, emb_norm, wn, unit_wnorm, weight_g):
    wn = wn or unit_wnorm
    if wn:
        v_norm = jnp.sqrt(jnp.sum(weight * weight, axis=1, keepdims=True))
        g = jnp.ones((weight.shape[0], 1), weight.dtype) if unit_wnorm else weight_g
        w_eff = g * weight / v_norm
    else:
        w_eff = weight
    if emb_norm:
        n = jnp.sqrt(jnp.sum(x * x, axis=-1, keepdims=True))
        x = x / jnp.maximum(n, 1e-12)
    return x @ w_eff.T + bias


if __name__ == "__main__":
    key = jax.random.PRNGKey(0)
    k_x, k_w, k_b, k_g = jax.random.split(key, 4)

    batch, input_dim, num_classes = 8, 32, 16
    x = jax.random.normal(k_x, (batch, input_dim), dtype=jnp.float32)

    # Deterministic parameter init (nn.Linear shapes: (out, in), (out,))
    bound = 1.0 / (input_dim ** 0.5)
    weight = jax.random.uniform(k_w, (num_classes, input_dim),
                                minval=-bound, maxval=bound, dtype=jnp.float32)
    bias = jax.random.uniform(k_b, (num_classes,),
                              minval=-bound, maxval=bound, dtype=jnp.float32)
    weight_g = jax.random.uniform(k_g, (num_classes, 1),
                                  minval=0.5, maxval=1.5, dtype=jnp.float32)

    # Path 1: emb_norm + weight_norm with unit g (unit_wnorm=True forward).
    params = prepare_linear_encoder(weight, bias, wn=True, emb_norm=True,
                                    unit_wnorm=True, weight_g=weight_g)
    out = jax.block_until_ready(linear_encoder_forward(x, params))
    ref = _reference(x, weight, bias, emb_norm=True, wn=True,
                     unit_wnorm=True, weight_g=weight_g)
    assert out.shape == (batch, num_classes)
    assert jnp.allclose(out, ref, atol=1e-5, rtol=1e-5), \
        float(jnp.max(jnp.abs(out - ref)))

    # Path 2: plain Linear (no emb_norm, no weight_norm).
    params2 = prepare_linear_encoder(weight, bias, wn=False, emb_norm=False)
    out2 = jax.block_until_ready(linear_encoder_forward(x, params2))
    ref2 = _reference(x, weight, bias, emb_norm=False, wn=False,
                      unit_wnorm=False, weight_g=None)
    assert jnp.allclose(out2, ref2, atol=1e-5, rtol=1e-5), \
        float(jnp.max(jnp.abs(out2 - ref2)))

    print("KERNEL_OK")
</pallas_src>

<mosaic_0001>
module attributes {stable_mosaic.version = 11 : i64} {
  func.func @_linear_encoder_kernel(%arg0: i32, %arg1: i32, %arg2: i32, %arg3: memref<8x128xf32, #tpu.memory_space<vmem>>, %arg4: memref<128x128xf32, #tpu.memory_space<vmem>>, %arg5: memref<8x1xf32, #tpu.memory_space<vmem>>, %arg6: memref<1x128xf32, #tpu.memory_space<vmem>>, %arg7: memref<8x128xf32, #tpu.memory_space<vmem>>, %arg8: memref<8x128xf32, #tpu.memory_space<vmem>>) attributes {dimension_semantics = [#tpu.dimension_semantics<parallel>, #tpu.dimension_semantics<parallel>, #tpu.dimension_semantics<arbitrary>], iteration_bounds = array<i64: 1, 1, 1>, scalar_prefetch = 0 : i64, scratch_operands = 1 : i64, tpu.core_type = #tpu.core_type<tc>, window_params = [{transform_indices = @transform_0, window_bounds = array<i64: 8, 128>}, {transform_indices = @transform_1, window_bounds = array<i64: 128, 128>}, {transform_indices = @transform_2, window_bounds = array<i64: 8, 1>}, {transform_indices = @transform_3, window_bounds = array<i64: 1, 128>}, {transform_indices = @transform_4, window_bounds = array<i64: 8, 128>}]} {
    %c0_i32 = arith.constant 0 : i32
    %0 = arith.cmpi eq, %arg2, %c0_i32 : i32
    %1 = arith.extui %0 : i1 to i32
    %c0_i32_0 = arith.constant 0 : i32
    %2 = arith.cmpi ne, %1, %c0_i32_0 : i32
    scf.if %2 {
      %cst_10 = arith.constant 0.000000e+00 : f32
      %12 = vector.broadcast %cst_10 : f32 to vector<8x128xf32>
      %c0_11 = arith.constant 0 : index
      %c0_12 = arith.constant 0 : index
      %13 = vector.load %arg8[%c0_11, %c0_12] : memref<8x128xf32, #tpu.memory_space<vmem>>, vector<8x128xf32>
      tpu.vector_store %arg8[%c0_11, %c0_12], %12 {strides = array<i32>} : memref<8x128xf32, #tpu.memory_space<vmem>>, vector<8x128xf32>,
    } else {
    }
    %c0 = arith.constant 0 : index
    %c0_1 = arith.constant 0 : index
    %3 = vector.load %arg8[%c0, %c0_1] : memref<8x128xf32, #tpu.memory_space<vmem>>, vector<8x128xf32>
    %c0_2 = arith.constant 0 : index
    %c0_3 = arith.constant 0 : index
    %4 = vector.load %arg3[%c0_2, %c0_3] : memref<8x128xf32, #tpu.memory_space<vmem>>, vector<8x128xf32>
    %c0_4 = arith.constant 0 : index
    %c0_5 = arith.constant 0 : index
    %5 = vector.load %arg4[%c0_4, %c0_5] : memref<128x128xf32, #tpu.memory_space<vmem>>, vector<128x128xf32>
    %cst = arith.constant dense<0.000000e+00> : vector<8x128xf32>
    %6 = tpu.matmul %4, %5, %cst {dimension_numbers = #tpu.dot_dimension_numbers<[1], [0], [0], [1], [0, 0, 1, 1], [], []>} : vector<8x128xf32>, vector<128x128xf32>, vector<8x128xf32> -> vector<8x128xf32>
    %7 = arith.addf %3, %6 : vector<8x128xf32>
    %c0_6 = arith.constant 0 : index
    %c0_7 = arith.constant 0 : index
    %8 = vector.load %arg8[%c0_6, %c0_7] : memref<8x128xf32, #tpu.memory_space<vmem>>, vector<8x128xf32>
    tpu.vector_store %arg8[%c0_6, %c0_7], %7 {strides = array<i32>} : memref<8x128xf32, #tpu.memory_space<vmem>>, vector<8x128xf32>,
    %c0_i32_8 = arith.constant 0 : i32
    %9 = arith.cmpi eq, %arg2, %c0_i32_8 : i32
    %10 = arith.extui %9 : i1 to i32
    %c0_i32_9 = arith.constant 0 : i32
    %11 = arith.cmpi ne, %10, %c0_i32_9 : i32
    scf.if %11 {
      %c0_10 = arith.constant 0 : index
      %c0_11 = arith.constant 0 : index
      %12 = vector.load %arg8[%c0_10, %c0_11] : memref<8x128xf32, #tpu.memory_space<vmem>>, vector<8x128xf32>
      %c0_12 = arith.constant 0 : index
      %c0_13 = arith.constant 0 : index
      %13 = vector.load %arg5[%c0_12, %c0_13] : memref<8x1xf32, #tpu.memory_space<vmem>>, vector<8x1xf32>
      %14 = vector.broadcast %13 : vector<8x1xf32> to vector<8x128xf32>
      %15 = arith.mulf %12, %14 : vector<8x128xf32>
      %c0_14 = arith.constant 0 : index
      %c0_15 = arith.constant 0 : index
      %16 = vector.load %arg6[%c0_14, %c0_15] : memref<1x128xf32, #tpu.memory_space<vmem>>, vector<1x128xf32>
      %17 = vector.broadcast %16 : vector<1x128xf32> to vector<8x128xf32>
      %18 = arith.addf %15, %17 : vector<8x128xf32>
      %c0_16 = arith.constant 0 : index
      %c0_17 = arith.constant 0 : index
      %19 = vector.load %arg7[%c0_16, %c0_17] : memref<8x128xf32, #tpu.memory_space<vmem>>, vector<8x128xf32>
      tpu.vector_store %arg7[%c0_16, %c0_17], %18 {strides = array<i32>} : memref<8x128xf32, #tpu.memory_space<vmem>>, vector<8x128xf32>,
    } else {
    }
    return
  }
  func.func @transform_0(%arg0: i32, %arg1: i32, %arg2: i32) -> (i32, i32) {
    %c0_i32 = arith.constant 0 : i32
    return %arg0, %arg2 : i32, i32
  }
  func.func @transform_1(%arg0: i32, %arg1: i32, %arg2: i32) -> (i32, i32) {
    %c0_i32 = arith.constant 0 : i32
    return %arg2, %arg1 : i32, i32
  }
  func.func @transform_2(%arg0: i32, %arg1: i32, %arg2: i32) -> (i32, i32) {
    %c0_i32 = arith.constant 0 : i32
    %c0_i32_0 = arith.constant 0 : i32
    return %arg0, %c0_i32 : i32, i32
  }
  func.func @transform_3(%arg0: i32, %arg1: i32, %arg2: i32) -> (i32, i32) {
    %c0_i32 = arith.constant 0 : i32
    %c0_i32_0 = arith.constant 0 : i32
    return %c0_i32, %arg1 : i32, i32
  }
  func.func @transform_4(%arg0: i32, %arg1: i32, %arg2: i32) -> (i32, i32) {
    %c0_i32 = arith.constant 0 : i32
    return %arg0, %arg1 : i32, i32
  }
}

</mosaic_0001>

<llo_original>
// kernel: _linear_encoder_apply.1
$region0: #{_linear_encoder_apply.1}
  #allocation0 [shape = 'u32[]', space=smem, size = 0x4, offset = 0x4, fixed_abs, tag = 'smem constant byte address 0x4 - core index']
  #allocation1 [shape = 'u32[144,128]{1,0:T(1,128)}', space=vmem, size = 0x12000, scoped, tag = 'internal scratch']
  #allocation2 [shape = 'f32[8,128]{1,0:T(8,128)}', space=vmem, size = 0x1000, scoped, tag = 'scratch operand']
  %s0 = inlined_call_operand.vmem [shape: f32[8,128], index: 0, kind: input, shape index: {}]
  %s1 = inlined_call_operand.hbm [shape: f32[128,128], index: 1, kind: input, shape index: {}]
  %s2 = inlined_call_operand.vmem [shape: f32[8,1], index: 2, kind: input, shape index: {}]
  %s3 = inlined_call_operand.vmem [shape: f32[1,128], index: 3, kind: input, shape index: {}]
  %s4 = inlined_call_operand.hbm [shape: f32[8,128], index: 4, kind: output, shape index: {}]
  %s5 = sld [smem:[#allocation0]]
  $region38: #{_linear_encoder_apply.1} parent=0
    _
  %s7 = ssub.s32 1, %s5
  %s8 = scalar_select 0, %s7, %s5
  $region1: #{_linear_encoder_apply.1} parent=0
    #allocation3 [shape = 'u8[65536]{0}', space=vmem, size = 0x10000, scoped, tag = 'input window, operand 1, single buffered']
    #allocation4 [shape = 's32[1]{0}', space=sflag, size = 0x4, scoped, tag = 'scoped memory for _linear_encoder_apply.1']
    #allocation5 [shape = 's32[1]{0}', space=sflag, size = 0x4, scoped, tag = 'scoped memory for _linear_encoder_apply.1']
    #allocation6 [shape = 'u8[4096]{0}', space=vmem, size = 0x1000, scoped, tag = 'output window, operand 0, single buffered']
    %9 = vsyncpa [#allocation4], 0
    %10 = vsyncpa [#allocation5], 0
    // Predicated region
    $region2: #{_linear_encoder_apply.1} parent=1 // pred_check
      _
    $region3: #{_linear_encoder_apply.1} parent=1 // pred_check_branch
      %12 = sbr.rel (0) target = $region5
    $region4: #{_linear_encoder_apply.1} parent=1 // pred_region
      _
    $region5: #{_linear_encoder_apply.1} parent=1 // pred_fallthru
      _
    // Predicated region
    $region6: #{_linear_encoder_apply.1} parent=1 // pred_check
      _
    $region7: #{_linear_encoder_apply.1} parent=1 // pred_check_branch
      %14 = sbr.rel (0) target = $region9
    $region8: #{_linear_encoder_apply.1} parent=1 // pred_region
      %s16 = ssub.s32 2048, 2048
      %17 = vsyncadd [#allocation4], %s16
      %s18 = sshll.u32 [#allocation3], 4
      %s19 = int_to_ptr.vmem [resolvable:$true] %s18
      %24 = dma.hbm_to_vmem [thread:$0]  %s1, 2048, %s19, [#allocation4], 128, 128, 8
    $region9: #{_linear_encoder_apply.1} parent=1 // pred_fallthru
      _
    // Predicated region
    $region10: #{_linear_encoder_apply.1} parent=1 // pred_check
      _
    $region11: #{_linear_encoder_apply.1} parent=1 // pred_check_branch
      %26 = sbr.rel (0) target = $region13
    $region12: #{_linear_encoder_apply.1} parent=1 // pred_region
      _
    $region13: #{_linear_encoder_apply.1} parent=1 // pred_fallthru
      _
    // Predicated region
    $region14: #{_linear_encoder_apply.1} parent=1 // pred_check
      _
    $region15: #{_linear_encoder_apply.1} parent=1 // pred_check_branch
      %28 = sbr.rel (0) target = $region17
    $region16: #{_linear_encoder_apply.1} parent=1 // pred_region
      _
    $region17: #{_linear_encoder_apply.1} parent=1 // pred_fallthru
      _
    // Predicated region
    $region18: #{_linear_encoder_apply.1} parent=1 // pred_check
      _
    $region19: #{_linear_encoder_apply.1} parent=1 // pred_check_branch
      %30 = sbr.rel (0) target = $region21
    $region20: #{_linear_encoder_apply.1} parent=1 // pred_region
      %31 = dma.done [#allocation4], 2048
    $region21: #{_linear_encoder_apply.1} parent=1 // pred_fallthru
      _
    %p32 = scmp.eq.s32.totalorder 0, 0
    // Predicated region
    $region22: #{_linear_encoder_apply.1} parent=1 // pred_check
      %p33 = pneg %p32
    $region23: #{_linear_encoder_apply.1} parent=1 // pred_check_branch
      %35 = sbr.rel (%p33) target = $region25
    $region24: #{_linear_encoder_apply.1} parent=1 // pred_region
      %36 = vst [vmem:[#allocation2] sm:$0xff] 0.0
    $region25: #{_linear_encoder_apply.1} parent=1 // pred_fallthru
      _
    %v37 = vld [vmem:[#allocation2] sm:$0xff]
    %v38 = vld [vmem:[%s0] sm:$0xff]
    %v39 = vld [vmem:[#allocation3] sm:$0xff]
    %v40 = vld [vmem:[#allocation3 + $0x8] sm:$0xff]
    %v41 = vld [vmem:[#allocation3 + $0x10] sm:$0xff]
    %v42 = vld [vmem:[#allocation3 + $0x18] sm:$0xff]
    %v43 = vld [vmem:[#allocation3 + $0x20] sm:$0xff]
    %v44 = vld [vmem:[#allocation3 + $0x28] sm:$0xff]
    %v45 = vld [vmem:[#allocation3 + $0x30] sm:$0xff]
    %v46 = vld [vmem:[#allocation3 + $0x38] sm:$0xff]
    %v47 = vld [vmem:[#allocation3 + $0x40] sm:$0xff]
    %v48 = vld [vmem:[#allocation3 + $0x48] sm:$0xff]
    %v49 = vld [vmem:[#allocation3 + $0x50] sm:$0xff]
    %v50 = vld [vmem:[#allocation3 + $0x58] sm:$0xff]
    %v51 = vld [vmem:[#allocation3 + $0x60] sm:$0xff]
    %v52 = vld [vmem:[#allocation3 + $0x68] sm:$0xff]
    %v53 = vld [vmem:[#allocation3 + $0x70] sm:$0xff]
    %v54 = vld [vmem:[#allocation3 + $0x78] sm:$0xff]
    %55 = vmatprep.subr.mxu0 0.0
    %56 = vmatpush1.msra.mxu0 %v54
    %57 = vmatprep.subr.mxu0 0.0
    %58 = vmatpush1.msra.mxu0 %v53
    %59 = vmatprep.subr.mxu0 0.0
    %60 = vmatpush1.msra.mxu0 %v52
    %61 = vmatprep.subr.mxu0 0.0
    %62 = vmatpush1.msra.mxu0 %v51
    %63 = vmatprep.subr.mxu0 0.0
    %64 = vmatpush1.msra.mxu0 %v50
    %65 = vmatprep.subr.mxu0 0.0
    %66 = vmatpush1.msra.mxu0 %v49
    %67 = vmatprep.subr.mxu0 0.0
    %68 = vmatpush1.msra.mxu0 %v48
    %69 = vmatprep.subr.mxu0 0.0
    %70 = vmatpush1.msra.mxu0 %v47
    %71 = vmatprep.subr.mxu0 0.0
    %72 = vmatpush1.msra.mxu0 %v46
    %73 = vmatprep.subr.mxu0 0.0
    %74 = vmatpush1.msra.mxu0 %v45
    %75 = vmatprep.subr.mxu0 0.0
    %76 = vmatpush1.msra.mxu0 %v44
    %77 = vmatprep.subr.mxu0 0.0
    %78 = vmatpush1.msra.mxu0 %v43
    %79 = vmatprep.subr.mxu0 0.0
    %80 = vmatpush1.msra.mxu0 %v42
    %81 = vmatprep.subr.mxu0 0.0
    %82 = vmatpush1.msra.mxu0 %v41
    %83 = vmatprep.subr.mxu0 0.0
    %84 = vmatpush1.msra.mxu0 %v40
    %85 = vmatprep.subr.mxu0 0.0
    %86 = vmatpush1.msra.mxu0 %v39
    %87 = vmatprep.subr.mxu0 0.0
    %88 = vmatpush2.msra.mxu0 0.0
    %89 = vmatprep.subr.mxu0 0.0
    %90 = vmatpush2.msra.mxu0 0.0
    %91 = vmatprep.subr.mxu0 0.0
    %92 = vmatpush2.msra.mxu0 0.0
    %93 = vmatprep.subr.mxu0 0.0
    %94 = vmatpush2.msra.mxu0 0.0
    %95 = vmatprep.subr.mxu0 0.0
    %96 = vmatpush2.msra.mxu0 0.0
    %97 = vmatprep.subr.mxu0 0.0
    %98 = vmatpush2.msra.mxu0 0.0
    %99 = vmatprep.subr.mxu0 0.0
    %100 = vmatpush2.msra.mxu0 0.0
    %101 = vmatprep.subr.mxu0 0.0
    %102 = vmatpush2.msra.mxu0 0.0
    %103 = vmatprep.subr.mxu0 0.0
    %104 = vmatpush2.msra.mxu0 0.0
    %105 = vmatprep.subr.mxu0 0.0
    %106 = vmatpush2.msra.mxu0 0.0
    %107 = vmatprep.subr.mxu0 0.0
    %108 = vmatpush2.msra.mxu0 0.0
    %109 = vmatprep.subr.mxu0 0.0
    %110 = vmatpush2.msra.mxu0 0.0
    %111 = vmatprep.subr.mxu0 0.0
    %112 = vmatpush2.msra.mxu0 0.0
    %113 = vmatprep.subr.mxu0 0.0
    %114 = vmatpush2.msra.mxu0 0.0
    %115 = vmatprep.subr.mxu0 0.0
    %116 = vmatpush2.msra.mxu0 0.0
    %117 = vmatprep.subr.mxu0 0.0
    %118 = vmatpush2.msra.mxu0 0.0
    %119 = vmatprep.mubr.f32.mxu0 0.0
    %120 = vmatmul.mubr.f32.gmra.mxu0 %v38
    %v121 = vpop.f32.mrf.mxu0
    %v122 = vadd.f32 0.0, %v121
    %v123 = vpop.f32.mrf.mxu0
    %124 = vdwg.mxu0
    %v125 = vadd.f32 %v37, %v122
    %126 = vst [vmem:[#allocation2] sm:$0xff] %v125
    // Predicated region
    $region26: #{_linear_encoder_apply.1} parent=1 // pred_check
      %p127 = pneg %p32
    $region27: #{_linear_encoder_apply.1} parent=1 // pred_check_branch
      %129 = sbr.rel (%p127) target = $region29
    $region28: #{_linear_encoder_apply.1} parent=1 // pred_region
      %v130 = vld [vmem:[#allocation2] sm:$0xff]
      %v131 = vld [vmem:[%s2] sm:$0xff]
      %133 = vset.pattern.permute.xlu0 0
      %134 = vperm.xlu0 %133, %v131
      %v135 = vpop.permute.xlu0 %134
      %v137 = vmul.f32 %v130, %v135
      %v138 = vld [vmem:[%s3] sm:$0x1]
      %v140 = vlaneseq
      %v141 = vshrl.u32 %v140, 7
      %v142 = vsub.s32 0, %v141
      %v143 = vrot.slane %v138, %v142
      %v145 = vadd.f32 %v137, %v143
      %146 = vst [vmem:[#allocation6] sm:$0xff] %v145
    $region29: #{_linear_encoder_apply.1} parent=1 // pred_fallthru
      _
    // Predicated region
    $region30: #{_linear_encoder_apply.1} parent=1 // pred_check
      _
    $region31: #{_linear_encoder_apply.1} parent=1 // pred_check_branch
      %148 = sbr.rel (0) target = $region33
    $region32: #{_linear_encoder_apply.1} parent=1 // pred_region
      %s150 = ssub.s32 128, 128
      %151 = vsyncadd [#allocation5], %s150
      %s153 = sshll.u32 [#allocation6], 4
      %s154 = int_to_ptr.vmem [resolvable:$true] %s153
      %156 = dma.vmem_to_hbm [thread:$0]  %s154, 128, %s4, [#allocation5]
    $region33: #{_linear_encoder_apply.1} parent=1 // pred_fallthru
      _
    // Predicated region
    $region34: #{_linear_encoder_apply.1} parent=1 // pred_check
      _
    $region35: #{_linear_encoder_apply.1} parent=1 // pred_check_branch
      %158 = sbr.rel (0) target = $region37
    $region36: #{_linear_encoder_apply.1} parent=1 // pred_region
      %159 = dma.done [#allocation5], 128
    $region37: #{_linear_encoder_apply.1} parent=1 // pred_fallthru
      _
    %160 = vsyncpa [#allocation4], 1
    %161 = vsyncpa [#allocation5], 1

</llo_original>
